<compile_context>
chip_gen: v7x
topology: tpu7x:2x2x1
jax: 0.10.0
libtpu: 0.0.40
codegen_flags: <defaults>
</compile_context>

<pallas_src>
import jax
import jax.numpy as jnp
from jax.experimental import pallas as pl
from jax.experimental.pallas import tpu as pltpu


def _round_up(x, m):
    return ((x + m - 1) // m) * m


def _pick_tile(batch, block_m):
    """Batch tile size.

    Small batches: a single 16-row-aligned tile.
    Large batches: multiples of 256 (MXU friendly), capped at block_m, and
    chosen so the grid has at least 2 steps (lets v7x's two TCs split it).
    """
    if batch <= 256:
        return _round_up(max(batch, 1), 16)
    half = _round_up((batch + 1) // 2, 256)
    return max(256, min(block_m, half))


def _batch_semantics():
    """CORE_PARALLEL shards the batch grid axis across v7x's two TensorCores;
    plain "parallel" elsewhere (single-TC chips)."""
    try:
        kind = jax.devices()[0].device_kind.lower()
    except Exception:
        kind = ""
    if "v7" in kind or "7x" in kind:
        return (pltpu.CORE_PARALLEL,)
    return ("parallel",)


def _actor_kernel(ma_ref, x_ref, w1_ref, b1_ref, w2_ref, b2_ref, w3_ref, b3_ref,
                  o_ref):
    max_action = ma_ref[0, 0]                       # fp32 scalar from SMEM

    # Layer 1: Linear(state_dim -> 256) + ReLU, fully fp32 (K is tiny, keeps
    # input precision; no wrapper-side bf16 cast of x needed).
    h1 = jnp.dot(x_ref[...], w1_ref[...],
                 preferred_element_type=jnp.float32) + b1_ref[...]
    h1 = jnp.maximum(h1, 0.0).astype(jnp.bfloat16)

    # Layer 2: Linear(256 -> 256) + ReLU  (bf16 matmul, fp32 accum/epilogue)
    h2 = jnp.dot(h1, w2_ref[...],
                 preferred_element_type=jnp.float32) + b2_ref[...]
    h2 = jnp.maximum(h2, 0.0).astype(jnp.bfloat16)

    # Layer 3 on the 128-lane-padded head, then slice back to the real
    # action_dim and store the narrow output directly (no padded writeback).
    y = jnp.dot(h2, w3_ref[...],
                preferred_element_type=jnp.float32) + b3_ref[...]
    act = y[:, : o_ref.shape[-1]]                   # static lane slice, in-tile
    o_ref[...] = (max_action * jnp.tanh(act)).astype(o_ref.dtype)


def prepare_actor_params(params):
    """One-time weight prep (call when params change, NOT per forward):
    bf16 casts for the hidden/output layers (MXU path) and lane-padding of the
    narrow l3 head to 128 so the final matmul stays dense."""
    action_dim = params["w3"].shape[1]
    n_pad = _round_up(action_dim, 128)
    w3, b3 = params["w3"], params["b3"]
    if n_pad != action_dim:
        w3 = jnp.pad(w3, ((0, 0), (0, n_pad - action_dim)))
        b3 = jnp.pad(b3, ((0, 0), (0, n_pad - action_dim)))
    return dict(
        w1=params["w1"].astype(jnp.float32),   # layer 1 stays fp32
        b1=params["b1"].astype(jnp.float32),
        w2=params["w2"].astype(jnp.bfloat16),
        b2=params["b2"].astype(jnp.float32),
        w3=w3.astype(jnp.bfloat16),
        b3=b3.astype(jnp.float32),
        action_dim=action_dim,                 # real (unpadded) head width
    )


def actor_forward(x, prepared, max_action, *, block_m=1024):
    """Run the Actor MLP forward pass in one Pallas kernel.

    x:        [batch, state_dim] float32
    prepared: output of prepare_actor_params()
    """
    batch, state_dim = x.shape
    hidden = prepared["w1"].shape[1]
    n_pad = prepared["w3"].shape[1]
    action_dim = prepared["action_dim"]

    x = x.astype(jnp.float32)

    tm = _pick_tile(batch, block_m)
    padded_batch = _round_up(batch, tm)
    grid = (padded_batch // tm,)

    x_p = x
    if padded_batch != batch:
        x_p = jnp.pad(x, ((0, padded_batch - batch), (0, 0)))

    ma = jnp.full((1, 1), max_action, dtype=jnp.float32)   # runtime scalar -> SMEM

    resident = lambda shape: pl.BlockSpec(shape, lambda i: (0, 0))

    def call(dim_sem):
        return pl.pallas_call(
            _actor_kernel,
            out_shape=jax.ShapeDtypeStruct((padded_batch, action_dim), jnp.float32),
            grid=grid,
            in_specs=[
                pl.BlockSpec(memory_space=pltpu.MemorySpace.SMEM),   # max_action
                pl.BlockSpec((tm, state_dim), lambda i: (i, 0)),     # x tile
                resident((state_dim, hidden)),                       # w1 (fp32)
                resident((1, hidden)),                               # b1
                resident((hidden, hidden)),                          # w2 (bf16)
                resident((1, hidden)),                               # b2
                resident((hidden, n_pad)),                           # w3 (bf16, padded)
                resident((1, n_pad)),                                # b3 (padded)
            ],
            # Narrow, full-extent last dim: writes only action_dim columns.
            out_specs=pl.BlockSpec((tm, action_dim), lambda i: (i, 0)),
            compiler_params=pltpu.CompilerParams(dimension_semantics=dim_sem),
        )(ma, x_p, prepared["w1"], prepared["b1"], prepared["w2"],
          prepared["b2"], prepared["w3"], prepared["b3"])

    dim_sem = _batch_semantics()
    try:
        out = call(dim_sem)
    except Exception:
        if dim_sem == ("parallel",):
            raise
        out = call(("parallel",))            # conservative fallback

    return out if padded_batch == batch else out[:batch]


def init_actor_params(key, state_dim, action_dim, hidden=256):
    """Deterministic PyTorch-style init: U(-1/sqrt(fan_in), 1/sqrt(fan_in)).

    Weights are stored transposed vs PyTorch, i.e. [in_features, out_features],
    so each layer is  y = x @ W + b ; biases are [1, out_features].
    """
    ks = jax.random.split(key, 6)

    def lin(kw, kb, fan_in, fan_out):
        bound = 1.0 / jnp.sqrt(fan_in)
        w = jax.random.uniform(kw, (fan_in, fan_out), jnp.float32, -bound, bound)
        b = jax.random.uniform(kb, (1, fan_out), jnp.float32, -bound, bound)
        return w, b

    w1, b1 = lin(ks[0], ks[1], state_dim, hidden)
    w2, b2 = lin(ks[2], ks[3], hidden, hidden)
    w3, b3 = lin(ks[4], ks[5], hidden, action_dim)
    return dict(w1=w1, b1=b1, w2=w2, b2=b2, w3=w3, b3=b3)


def actor_reference(x, params, max_action):
    h1 = jnp.maximum(x @ params["w1"] + params["b1"], 0.0)
    h2 = jnp.maximum(h1 @ params["w2"] + params["b2"], 0.0)
    return max_action * jnp.tanh(h2 @ params["w3"] + params["b3"])


if __name__ == "__main__":
    key = jax.random.PRNGKey(0)
    k_param, k_x = jax.random.split(key)

    batch = 8
    state_dim = 16
    action_dim = 8
    max_action = 2.0

    params = init_actor_params(k_param, state_dim, action_dim)
    prepared = prepare_actor_params(params)   # hoisted out of the per-step hot path
    x = jax.random.normal(k_x, (batch, state_dim), jnp.float32)

    out = actor_forward(x, prepared, max_action)
    out = jax.block_until_ready(out)

    ref = actor_reference(x, params, max_action)
    assert out.shape == (batch, action_dim)
    # Layers 2/3 use bf16 matmul inputs (fp32 accumulation) => loose tolerance.
    assert jnp.allclose(out, ref, atol=5e-2, rtol=5e-2), "mismatch vs reference"

    print("KERNEL_OK")
</pallas_src>

<mosaic_0001>
module attributes {stable_mosaic.version = 11 : i64} {
  func.func @_actor_kernel(%arg0: i32, %arg1: memref<1x1xf32, #tpu.memory_space<smem>>, %arg2: memref<16x16xf32, #tpu.memory_space<vmem>>, %arg3: memref<16x256xf32, #tpu.memory_space<vmem>>, %arg4: memref<1x256xf32, #tpu.memory_space<vmem>>, %arg5: memref<256x256xbf16, #tpu.memory_space<vmem>>, %arg6: memref<1x256xf32, #tpu.memory_space<vmem>>, %arg7: memref<256x128xbf16, #tpu.memory_space<vmem>>, %arg8: memref<1x128xf32, #tpu.memory_space<vmem>>, %arg9: memref<16x8xf32, #tpu.memory_space<vmem>>) attributes {dimension_semantics = [#tpu.dimension_semantics<parallel>], iteration_bounds = array<i64: 1>, scalar_prefetch = 0 : i64, scratch_operands = 0 : i64, tpu.core_type = #tpu.core_type<tc>, window_params = [{transform_indices = @transform_0, window_bounds = array<i64: 1, 1>}, {transform_indices = @transform_1, window_bounds = array<i64: 16, 16>}, {pipeline_mode = #tpu.pipeline_mode<synchronous>, transform_indices = @transform_2, window_bounds = array<i64: 16, 256>}, {pipeline_mode = #tpu.pipeline_mode<synchronous>, transform_indices = @transform_3, window_bounds = array<i64: 1, 256>}, {pipeline_mode = #tpu.pipeline_mode<synchronous>, transform_indices = @transform_4, window_bounds = array<i64: 256, 256>}, {pipeline_mode = #tpu.pipeline_mode<synchronous>, transform_indices = @transform_5, window_bounds = array<i64: 1, 256>}, {pipeline_mode = #tpu.pipeline_mode<synchronous>, transform_indices = @transform_6, window_bounds = array<i64: 256, 128>}, {pipeline_mode = #tpu.pipeline_mode<synchronous>, transform_indices = @transform_7, window_bounds = array<i64: 1, 128>}, {transform_indices = @transform_8, window_bounds = array<i64: 16, 8>}]} {
    %c0 = arith.constant 0 : index
    %c0_0 = arith.constant 0 : index
    %0 = memref.load %arg1[%c0, %c0_0] : memref<1x1xf32, #tpu.memory_space<smem>>
    %c0_1 = arith.constant 0 : index
    %c0_2 = arith.constant 0 : index
    %1 = vector.load %arg2[%c0_1, %c0_2] : memref<16x16xf32, #tpu.memory_space<vmem>>, vector<16x16xf32>
    %c0_3 = arith.constant 0 : index
    %c0_4 = arith.constant 0 : index
    %2 = vector.load %arg3[%c0_3, %c0_4] : memref<16x256xf32, #tpu.memory_space<vmem>>, vector<16x256xf32>
    %cst = arith.constant dense<0.000000e+00> : vector<16x256xf32>
    %3 = tpu.matmul %1, %2, %cst {dimension_numbers = #tpu.dot_dimension_numbers<[1], [0], [0], [1], [0, 0, 1, 1], [], []>} : vector<16x16xf32>, vector<16x256xf32>, vector<16x256xf32> -> vector<16x256xf32>
    %c0_5 = arith.constant 0 : index
    %c0_6 = arith.constant 0 : index
    %4 = vector.load %arg4[%c0_5, %c0_6] : memref<1x256xf32, #tpu.memory_space<vmem>>, vector<1x256xf32>
    %5 = vector.broadcast %4 : vector<1x256xf32> to vector<16x256xf32>
    %6 = arith.addf %3, %5 : vector<16x256xf32>
    %cst_7 = arith.constant 0.000000e+00 : f32
    %7 = vector.broadcast %cst_7 : f32 to vector<16x256xf32>
    %8 = arith.maximumf %6, %7 : vector<16x256xf32>
    %9 = arith.truncf %8 : vector<16x256xf32> to vector<16x256xbf16>
    %c0_8 = arith.constant 0 : index
    %c0_9 = arith.constant 0 : index
    %10 = vector.load %arg5[%c0_8, %c0_9] : memref<256x256xbf16, #tpu.memory_space<vmem>>, vector<256x256xbf16>
    %cst_10 = arith.constant dense<0.000000e+00> : vector<16x256xf32>
    %11 = tpu.matmul %9, %10, %cst_10 {dimension_numbers = #tpu.dot_dimension_numbers<[1], [0], [0], [1], [0, 0, 1, 1], [], []>} : vector<16x256xbf16>, vector<256x256xbf16>, vector<16x256xf32> -> vector<16x256xf32>
    %c0_11 = arith.constant 0 : index
    %c0_12 = arith.constant 0 : index
    %12 = vector.load %arg6[%c0_11, %c0_12] : memref<1x256xf32, #tpu.memory_space<vmem>>, vector<1x256xf32>
    %13 = vector.broadcast %12 : vector<1x256xf32> to vector<16x256xf32>
    %14 = arith.addf %11, %13 : vector<16x256xf32>
    %cst_13 = arith.constant 0.000000e+00 : f32
    %15 = vector.broadcast %cst_13 : f32 to vector<16x256xf32>
    %16 = arith.maximumf %14, %15 : vector<16x256xf32>
    %17 = arith.truncf %16 : vector<16x256xf32> to vector<16x256xbf16>
    %c0_14 = arith.constant 0 : index
    %c0_15 = arith.constant 0 : index
    %18 = vector.load %arg7[%c0_14, %c0_15] : memref<256x128xbf16, #tpu.memory_space<vmem>>, vector<256x128xbf16>
    %cst_16 = arith.constant dense<0.000000e+00> : vector<16x128xf32>
    %19 = tpu.matmul %17, %18, %cst_16 {dimension_numbers = #tpu.dot_dimension_numbers<[1], [0], [0], [1], [0, 0, 1, 1], [], []>} : vector<16x256xbf16>, vector<256x128xbf16>, vector<16x128xf32> -> vector<16x128xf32>
    %c0_17 = arith.constant 0 : index
    %c0_18 = arith.constant 0 : index
    %20 = vector.load %arg8[%c0_17, %c0_18] : memref<1x128xf32, #tpu.memory_space<vmem>>, vector<1x128xf32>
    %21 = vector.broadcast %20 : vector<1x128xf32> to vector<16x128xf32>
    %22 = arith.addf %19, %21 : vector<16x128xf32>
    %23 = vector.extract_strided_slice %22 {offsets = [0, 0], sizes = [16, 8], strides = [1, 1]} : vector<16x128xf32> to vector<16x8xf32>
    %24 = math.tanh %23 : vector<16x8xf32>
    %25 = vector.broadcast %0 : f32 to vector<16x8xf32>
    %26 = arith.mulf %25, %24 : vector<16x8xf32>
    %c0_19 = arith.constant 0 : index
    %c0_20 = arith.constant 0 : index
    %27 = vector.load %arg9[%c0_19, %c0_20] : memref<16x8xf32, #tpu.memory_space<vmem>>, vector<16x8xf32>
    tpu.vector_store %arg9[%c0_19, %c0_20], %26 {strides = array<i32>} : memref<16x8xf32, #tpu.memory_space<vmem>>, vector<16x8xf32>,
    return
  }
  func.func @transform_0(%arg0: i32) -> (i32, i32) {
    %c0_i32 = arith.constant 0 : i32
    %c0_i32_0 = arith.constant 0 : i32
    %c0_i32_1 = arith.constant 0 : i32
    return %c0_i32, %c0_i32_0 : i32, i32
  }
  func.func @transform_1(%arg0: i32) -> (i32, i32) {
    %c0_i32 = arith.constant 0 : i32
    %c0_i32_0 = arith.constant 0 : i32
    return %arg0, %c0_i32 : i32, i32
  }
  func.func @transform_2(%arg0: i32) -> (i32, i32) {
    %c0_i32 = arith.constant 0 : i32
    %c0_i32_0 = arith.constant 0 : i32
    %c0_i32_1 = arith.constant 0 : i32
    return %c0_i32, %c0_i32_0 : i32, i32
  }
  func.func @transform_3(%arg0: i32) -> (i32, i32) {
    %c0_i32 = arith.constant 0 : i32
    %c0_i32_0 = arith.constant 0 : i32
    %c0_i32_1 = arith.constant 0 : i32
    return %c0_i32, %c0_i32_0 : i32, i32
  }
  func.func @transform_4(%arg0: i32) -> (i32, i32) {
    %c0_i32 = arith.constant 0 : i32
    %c0_i32_0 = arith.constant 0 : i32
    %c0_i32_1 = arith.constant 0 : i32
    return %c0_i32, %c0_i32_0 : i32, i32
  }
  func.func @transform_5(%arg0: i32) -> (i32, i32) {
    %c0_i32 = arith.constant 0 : i32
    %c0_i32_0 = arith.constant 0 : i32
    %c0_i32_1 = arith.constant 0 : i32
    return %c0_i32, %c0_i32_0 : i32, i32
  }
  func.func @transform_6(%arg0: i32) -> (i32, i32) {
    %c0_i32 = arith.constant 0 : i32
    %c0_i32_0 = arith.constant 0 : i32
    %c0_i32_1 = arith.constant 0 : i32
    return %c0_i32, %c0_i32_0 : i32, i32
  }
  func.func @transform_7(%arg0: i32) -> (i32, i32) {
    %c0_i32 = arith.constant 0 : i32
    %c0_i32_0 = arith.constant 0 : i32
    %c0_i32_1 = arith.constant 0 : i32
    return %c0_i32, %c0_i32_0 : i32, i32
  }
  func.func @transform_8(%arg0: i32) -> (i32, i32) {
    %c0_i32 = arith.constant 0 : i32
    %c0_i32_0 = arith.constant 0 : i32
    return %arg0, %c0_i32 : i32, i32
  }
}

</mosaic_0001>

<llo_original>
// kernel: tpu_custom_call.1
$region0: #{tpu_custom_call.1}
  #allocation0 [shape = 'u32[]', space=smem, size = 0x4, offset = 0x4, fixed_abs, tag = 'smem constant byte address 0x4 - core index']
  #allocation1 [shape = 'u32[144,128]{1,0:T(1,128)}', space=vmem, size = 0x12000, scoped, tag = 'internal scratch']
  #allocation2 [shape = 'f32[1,1]{1,0:T(1,128)S(6)}', space=smem, size = 0x200, scoped, tag = 'scoped memory for tpu_custom_call.1']
  %s0 = inlined_call_operand.<no memory space> [shape: f32[1,1], index: 0, kind: input, shape index: {}]
  %s1 = inlined_call_operand.hbm [shape: f32[16,16], index: 1, kind: input, shape index: {}]
  %s2 = inlined_call_operand.hbm [shape: f32[16,256], index: 2, kind: input, shape index: {}]
  %s3 = inlined_call_operand.vmem [shape: f32[1,256], index: 3, kind: input, shape index: {}]
  %s4 = inlined_call_operand.hbm [shape: bf16[256,256], index: 4, kind: input, shape index: {}]
  %s5 = inlined_call_operand.vmem [shape: f32[1,256], index: 5, kind: input, shape index: {}]
  %s6 = inlined_call_operand.hbm [shape: bf16[256,128], index: 6, kind: input, shape index: {}]
  %s7 = inlined_call_operand.vmem [shape: f32[1,128], index: 7, kind: input, shape index: {}]
  %s8 = inlined_call_operand.vmem [shape: f32[16,8], index: 8, kind: output, shape index: {}]
  %s9 = sld [smem:[#allocation0]]
  $region58: #{tpu_custom_call.1} parent=0
    _
  %s11 = ssub.s32 1, %s9
  %s12 = scalar_select 0, %s11, %s9
  %13 = sst [smem:[#allocation2]] %s0
  $region1: #{tpu_custom_call.1} parent=0
    #allocation3 [shape = 'u8[8192]{0}', space=vmem, size = 0x2000, scoped, tag = 'input window, operand 1, single buffered']
    #allocation4 [shape = 's32[1]{0}', space=sflag, size = 0x4, scoped, tag = 'scoped memory for tpu_custom_call.1']
    #allocation5 [shape = 'u8[16384]{0}', space=vmem, size = 0x4000, scoped, tag = 'input window, operand 2, single buffered']
    #allocation6 [shape = 's32[1]{0}', space=sflag, size = 0x4, scoped, tag = 'scoped memory for tpu_custom_call.1']
    #allocation7 [shape = 'u8[131072]{0}', space=vmem, size = 0x20000, scoped, tag = 'input window, operand 4, single buffered']
    #allocation8 [shape = 'u8[65536]{0}', space=vmem, size = 0x10000, scoped, tag = 'input window, operand 6, single buffered']
    #allocation9 [shape = 's32[1]{0}', space=sflag, size = 0x4, scoped, tag = 'scoped memory for tpu_custom_call.1']
    %14 = vsyncpa [#allocation4], 0
    %15 = vsyncpa [#allocation6], 0
    %16 = vsyncpa [#allocation9], 0
    // Predicated region
    $region2: #{tpu_custom_call.1} parent=1 // pred_check
      _
    $region3: #{tpu_custom_call.1} parent=1 // pred_check_branch
      %18 = sbr.rel (0) target = $region5
    $region4: #{tpu_custom_call.1} parent=1 // pred_region
      _
    $region5: #{tpu_custom_call.1} parent=1 // pred_fallthru
      _
    // Predicated region
    $region6: #{tpu_custom_call.1} parent=1 // pred_check
      _
    $region7: #{tpu_custom_call.1} parent=1 // pred_check_branch
      %20 = sbr.rel (0) target = $region9
    $region8: #{tpu_custom_call.1} parent=1 // pred_region
      %s22 = ssub.s32 256, 256
      %23 = vsyncadd [#allocation4], %s22
      %s24 = sshll.u32 [#allocation3], 4
      %s25 = int_to_ptr.vmem [resolvable:$true] %s24
      %30 = dma.hbm_to_vmem [thread:$0]  %s1, 256, %s25, [#allocation4], 128, 128, 8
    $region9: #{tpu_custom_call.1} parent=1 // pred_fallthru
      _
    // Predicated region
    $region10: #{tpu_custom_call.1} parent=1 // pred_check
      _
    $region11: #{tpu_custom_call.1} parent=1 // pred_check_branch
      %32 = sbr.rel (0) target = $region13
    $region12: #{tpu_custom_call.1} parent=1 // pred_region
      %s34 = ssub.s32 512, 512
      %35 = vsyncadd [#allocation6], %s34
      %s36 = sshll.u32 [#allocation5], 4
      %s37 = int_to_ptr.vmem [resolvable:$true] %s36
      %42 = dma.hbm_to_vmem [thread:$0]  %s2, 512, %s37, [#allocation6], 256, 256, 16
    $region13: #{tpu_custom_call.1} parent=1 // pred_fallthru
      _
    // Predicated region
    $region14: #{tpu_custom_call.1} parent=1 // pred_check
      _
    $region15: #{tpu_custom_call.1} parent=1 // pred_check_branch
      %44 = sbr.rel (0) target = $region17
    $region16: #{tpu_custom_call.1} parent=1 // pred_region
      _
    $region17: #{tpu_custom_call.1} parent=1 // pred_fallthru
      _
    // Predicated region
    $region18: #{tpu_custom_call.1} parent=1 // pred_check
      _
    $region19: #{tpu_custom_call.1} parent=1 // pred_check_branch
      %46 = sbr.rel (0) target = $region21
    $region20: #{tpu_custom_call.1} parent=1 // pred_region
      %s48 = ssub.s32 4096, 4096
      %49 = vsyncadd [#allocation6], %s48
      %s50 = sshll.u32 [#allocation7], 4
      %s51 = int_to_ptr.vmem [resolvable:$true] %s50
      %56 = dma.hbm_to_vmem [thread:$0]  %s4, 4096, %s51, [#allocation6], 128, 128, 8
    $region21: #{tpu_custom_call.1} parent=1 // pred_fallthru
      _
    // Predicated region
    $region22: #{tpu_custom_call.1} parent=1 // pred_check
      _
    $region23: #{tpu_custom_call.1} parent=1 // pred_check_branch
      %58 = sbr.rel (0) target = $region25
    $region24: #{tpu_custom_call.1} parent=1 // pred_region
      _
    $region25: #{tpu_custom_call.1} parent=1 // pred_fallthru
      _
    // Predicated region
    $region26: #{tpu_custom_call.1} parent=1 // pred_check
      _
    $region27: #{tpu_custom_call.1} parent=1 // pred_check_branch
      %60 = sbr.rel (0) target = $region29
    $region28: #{tpu_custom_call.1} parent=1 // pred_region
      %s62 = ssub.s32 2048, 2048
      %63 = vsyncadd [#allocation9], %s62
      %s64 = sshll.u32 [#allocation8], 4
      %s65 = int_to_ptr.vmem [resolvable:$true] %s64
      %70 = dma.hbm_to_vmem [thread:$0]  %s6, 2048, %s65, [#allocation9], 64, 64, 4
    $region29: #{tpu_custom_call.1} parent=1 // pred_fallthru
      _
    // Predicated region
    $region30: #{tpu_custom_call.1} parent=1 // pred_check
      _
    $region31: #{tpu_custom_call.1} parent=1 // pred_check_branch
      %72 = sbr.rel (0) target = $region33
    $region32: #{tpu_custom_call.1} parent=1 // pred_region
      _
    $region33: #{tpu_custom_call.1} parent=1 // pred_fallthru
      _
    // Predicated region
    $region34: #{tpu_custom_call.1} parent=1 // pred_check
      _
    $region35: #{tpu_custom_call.1} parent=1 // pred_check_branch
      %74 = sbr.rel (0) target = $region37
    $region36: #{tpu_custom_call.1} parent=1 // pred_region
      %75 = dma.done [#allocation4], 256
    $region37: #{tpu_custom_call.1} parent=1 // pred_fallthru
      _
    // Predicated region
    $region38: #{tpu_custom_call.1} parent=1 // pred_check
      _
    $region39: #{tpu_custom_call.1} parent=1 // pred_check_branch
      %77 = sbr.rel (0) target = $region41
    $region40: #{tpu_custom_call.1} parent=1 // pred_region
      %78 = dma.done [#allocation6], 512
    $region41: #{tpu_custom_call.1} parent=1 // pred_fallthru
      _
    // Predicated region
    $region42: #{tpu_custom_call.1} parent=1 // pred_check
      _
    $region43: #{tpu_custom_call.1} parent=1 // pred_check_branch
      %80 = sbr.rel (0) target = $region45
    $region44: #{tpu_custom_call.1} parent=1 // pred_region
      %81 = dma.done [#allocation6], 4096
    $region45: #{tpu_custom_call.1} parent=1 // pred_fallthru
      _
    // Predicated region
    $region46: #{tpu_custom_call.1} parent=1 // pred_check
      _
    $region47: #{tpu_custom_call.1} parent=1 // pred_check_branch
      %83 = sbr.rel (0) target = $region49
    $region48: #{tpu_custom_call.1} parent=1 // pred_region
      %84 = dma.done [#allocation9], 2048
    $region49: #{tpu_custom_call.1} parent=1 // pred_fallthru
      _
    %s86 = sld [smem:[#allocation2]]
    %v87 = vld [vmem:[#allocation3] sm:$0xff]
    %v88 = vld [vmem:[#allocation3 + $0x8] sm:$0xff]
    %v89 = vld [vmem:[#allocation5] sm:$0xff]
    %v90 = vld [vmem:[#allocation5 + $0x8] sm:$0xff]
    %v91 = vld [vmem:[#allocation5 + $0x10] sm:$0xff]
    %v92 = vld [vmem:[#allocation5 + $0x18] sm:$0xff]
    %v93 = vld [vmem:[%s3] sm:$0x3]
    %v95 = vlaneseq
    %v96 = vshrl.u32 %v95, 7
    %v97 = vsub.s32 0, %v96
    %v98 = vrot.slane %v93, %v97
    %v99 = vlaneseq
    %v100 = vshrl.u32 %v99, 7
    %v101 = vsub.s32 1, %v100
    %v102 = vrot.slane %v93, %v101
    %vm105 = vcmask 130048
    %v107 = vsel %vm105, %v87, 0
    %v110 = vsel %vm105, %v88, 0
    %112 = vmatprep.subr.mxu0 %v90
    %113 = vmatpush1.msra.mxu0 %v89
    %114 = vmatprep.subr.mxu0 %v92
    %115 = vmatpush1.msra.mxu0 %v91
    %116 = vmatprep.subr.mxu0 0.0
    %117 = vmatpush1.msra.mxu0 0.0
    %118 = vmatprep.subr.mxu0 0.0
    %119 = vmatpush1.msra.mxu0 0.0
    %120 = vmatprep.subr.mxu0 0.0
    %121 = vmatpush1.msra.mxu0 0.0
    %122 = vmatprep.subr.mxu0 0.0
    %123 = vmatpush1.msra.mxu0 0.0
    %124 = vmatprep.subr.mxu0 0.0
    %125 = vmatpush1.msra.mxu0 0.0
    %126 = vmatprep.subr.mxu0 0.0
    %127 = vmatpush1.msra.mxu0 0.0
    %128 = vmatprep.subr.mxu0 0.0
    %129 = vmatpush1.msra.mxu0 0.0
    %130 = vmatprep.subr.mxu0 0.0
    %131 = vmatpush1.msra.mxu0 0.0
    %132 = vmatprep.subr.mxu0 0.0
    %133 = vmatpush1.msra.mxu0 0.0
    %134 = vmatprep.subr.mxu0 0.0
    %135 = vmatpush1.msra.mxu0 0.0
    %136 = vmatprep.subr.mxu0 0.0
    %137 = vmatpush1.msra.mxu0 0.0
    %138 = vmatprep.subr.mxu0 0.0
    %139 = vmatpush1.msra.mxu0 0.0
    %140 = vmatprep.subr.mxu0 0.0
    %141 = vmatpush1.msra.mxu0 0.0
    %142 = vmatprep.subr.mxu0 0.0
    %143 = vmatpush1.msra.mxu0 0.0
    %144 = vmatprep.subr.mxu0 0.0
    %145 = vmatpush1.msra.mxu0 0.0
    %146 = vmatprep.subr.mxu0 0.0
    %147 = vmatpush1.msra.mxu0 0.0
    %148 = vmatprep.subr.mxu0 0.0
    %149 = vmatpush1.msra.mxu0 0.0
    %150 = vmatprep.subr.mxu0 0.0
    %151 = vmatpush1.msra.mxu0 0.0
    %152 = vmatprep.subr.mxu0 0.0
    %153 = vmatpush1.msra.mxu0 0.0
    %154 = vmatprep.subr.mxu0 0.0
    %155 = vmatpush1.msra.mxu0 0.0
    %156 = vmatprep.subr.mxu0 0.0
    %157 = vmatpush1.msra.mxu0 0.0
    %158 = vmatprep.subr.mxu0 0.0
    %159 = vmatpush1.msra.mxu0 0.0
    %160 = vmatprep.subr.mxu0 0.0
    %161 = vmatpush1.msra.mxu0 0.0
    %162 = vmatprep.subr.mxu0 0.0
    %163 = vmatpush1.msra.mxu0 0.0
    %164 = vmatprep.subr.mxu0 0.0
    %165 = vmatpush1.msra.mxu0 0.0
    %166 = vmatprep.subr.mxu0 0.0
    %167 = vmatpush1.msra.mxu0 0.0
    %168 = vmatprep.subr.mxu0 0.0
    %169 = vmatpush1.msra.mxu0 0.0
    %170 = vmatprep.subr.mxu0 0.0
    %171 = vmatpush1.msra.mxu0 0.0
    %172 = vmatprep.subr.mxu0 0.0
    %173 = vmatpush1.msra.mxu0 0.0
    %174 = vmatprep.subr.mxu0 0.0
    %175 = vmatpush1.msra.mxu0 0.0
    %176 = vmatprep.mubr.f32.mxu0 0.0
    %177 = vmatmul.mubr.f32.gmra.mrb[0].mxu0 %v107
    %v178 = vpop.f32.mrb[0].mxu0
    %v179 = vadd.f32 %v98, %v178
    %v180 = vpop.f32.mrb[0].mxu0
    %v181 = vadd.f32 %v102, %v180
    %182 = vmatprep.mubr.f32.mxu0 0.0
    %183 = vmatmul.mubr.f32.gmra.mrb[0].mxu0 %v110
    %v184 = vpop.f32.mrb[0].mxu0
    %v185 = vadd.f32 %v98, %v184
    %v186 = vpop.f32.mrb[0].mxu0
    %v187 = vadd.f32 %v102, %v186
    %188 = vdwg.mxu0
    %v189 = vmax.f32 %v179, 0.0
    %v190 = vmax.f32 %v181, 0.0
    %v191 = vmax.f32 %v185, 0.0
    %v192 = vmax.f32 %v187, 0.0
    %v193 = vpack.c.bf16 %v191, %v189
    %v194 = vpack.c.bf16 %v192, %v190
    %v195 = vld [vmem:[#allocation7] sm:$0xff]
    %v196 = vld [vmem:[#allocation7 + $0x8] sm:$0xff]
    %v197 = vld [vmem:[#allocation7 + $0x10] sm:$0xff]
    %v198 = vld [vmem:[#allocation7 + $0x18] sm:$0xff]
    %v199 = vld [vmem:[#allocation7 + $0x20] sm:$0xff]
    %v200 = vld [vmem:[#allocation7 + $0x28] sm:$0xff]
    %v201 = vld [vmem:[#allocation7 + $0x30] sm:$0xff]
    %v202 = vld [vmem:[#allocation7 + $0x38] sm:$0xff]
    %v203 = vld [vmem:[#allocation7 + $0x40] sm:$0xff]
    %v204 = vld [vmem:[#allocation7 + $0x48] sm:$0xff]
    %v205 = vld [vmem:[#allocation7 + $0x50] sm:$0xff]
    %v206 = vld [vmem:[#allocation7 + $0x58] sm:$0xff]
    %v207 = vld [vmem:[#allocation7 + $0x60] sm:$0xff]
    %v208 = vld [vmem:[#allocation7 + $0x68] sm:$0xff]
    %v209 = vld [vmem:[#allocation7 + $0x70] sm:$0xff]
    %v210 = vld [vmem:[#allocation7 + $0x78] sm:$0xff]
    %v211 = vld [vmem:[#allocation7 + $0x80] sm:$0xff]
    %v212 = vld [vmem:[#allocation7 + $0x88] sm:$0xff]
    %v213 = vld [vmem:[#allocation7 + $0x90] sm:$0xff]
    %v214 = vld [vmem:[#allocation7 + $0x98] sm:$0xff]
    %v215 = vld [vmem:[#allocation7 + $0xa0] sm:$0xff]
    %v216 = vld [vmem:[#allocation7 + $0xa8] sm:$0xff]
    %v217 = vld [vmem:[#allocation7 + $0xb0] sm:$0xff]
    %v218 = vld [vmem:[#allocation7 + $0xb8] sm:$0xff]
    %v219 = vld [vmem:[#allocation7 + $0xc0] sm:$0xff]
    %v220 = vld [vmem:[#allocation7 + $0xc8] sm:$0xff]
    %v221 = vld [vmem:[#allocation7 + $0xd0] sm:$0xff]
    %v222 = vld [vmem:[#allocation7 + $0xd8] sm:$0xff]
    %v223 = vld [vmem:[#allocation7 + $0xe0] sm:$0xff]
    %v224 = vld [vmem:[#allocation7 + $0xe8] sm:$0xff]
    %v225 = vld [vmem:[#allocation7 + $0xf0] sm:$0xff]
    %v226 = vld [vmem:[#allocation7 + $0xf8] sm:$0xff]
    %v227 = vld [vmem:[%s5] sm:$0x3]
    %v229 = vlaneseq
    %v230 = vshrl.u32 %v229, 7
    %v231 = vsub.s32 0, %v230
    %v232 = vrot.slane %v227, %v231
    %v233 = vlaneseq
    %v234 = vshrl.u32 %v233, 7
    %v235 = vsub.s32 1, %v234
    %v236 = vrot.slane %v227, %v235
    %v271 = vunpack.c.l.b16 %v195
    %v272 = vunpack.c.h.b16 %v195
    %v273 = vunpack.c.l.b16 %v196
    %v274 = vunpack.c.h.b16 %v196
    %v275 = vunpack.c.l.b16 %v197
    %v276 = vunpack.c.h.b16 %v197
    %v277 = vunpack.c.l.b16 %v198
    %v278 = vunpack.c.h.b16 %v198
    %v279 = vunpack.c.l.b16 %v199
    %v280 = vunpack.c.h.b16 %v199
    %v281 = vunpack.c.l.b16 %v200
    %v282 = vunpack.c.h.b16 %v200
    %v283 = vunpack.c.l.b16 %v201
    %v284 = vunpack.c.h.b16 %v201
    %v285 = vunpack.c.l.b16 %v202
    %v286 = vunpack.c.h.b16 %v202
    %v287 = vunpack.c.l.b16 %v203
    %v288 = vunpack.c.h.b16 %v203
    %v289 = vunpack.c.l.b16 %v204
    %v290 = vunpack.c.h.b16 %v204
    %v291 = vunpack.c.l.b16 %v205
    %v292 = vunpack.c.h.b16 %v205
    %v293 = vunpack.c.l.b16 %v206
    %v294 = vunpack.c.h.b16 %v206
    %v295 = vunpack.c.l.b16 %v207
    %v296 = vunpack.c.h.b16 %v207
    %v297 = vunpack.c.l.b16 %v208
    %v298 = vunpack.c.h.b16 %v208
    %v299 = vunpack.c.l.b16 %v209
    %v300 = vunpack.c.h.b16 %v209
    %v301 = vunpack.c.l.b16 %v210
    %v302 = vunpack.c.h.b16 %v210
    %v303 = vunpack.c.l.b16 %v211
    %v304 = vunpack.c.h.b16 %v211
    %v305 = vunpack.c.l.b16 %v212
    %v306 = vunpack.c.h.b16 %v212
    %v307 = vunpack.c.l.b16 %v213
    %v308 = vunpack.c.h.b16 %v213
    %v309 = vunpack.c.l.b16 %v214
    %v310 = vunpack.c.h.b16 %v214
    %v311 = vunpack.c.l.b16 %v215
    %v312 = vunpack.c.h.b16 %v215
    %v313 = vunpack.c.l.b16 %v216
    %v314 = vunpack.c.h.b16 %v216
    %v315 = vunpack.c.l.b16 %v217
    %v316 = vunpack.c.h.b16 %v217
    %v317 = vunpack.c.l.b16 %v218
    %v318 = vunpack.c.h.b16 %v218
    %v319 = vunpack.c.l.b16 %v219
    %v320 = vunpack.c.h.b16 %v219
    %v321 = vunpack.c.l.b16 %v220
    %v322 = vunpack.c.h.b16 %v220
    %v323 = vunpack.c.l.b16 %v221
    %v324 = vunpack.c.h.b16 %v221
    %v325 = vunpack.c.l.b16 %v222
    %v326 = vunpack.c.h.b16 %v222
    %v327 = vunpack.c.l.b16 %v223
    %v328 = vunpack.c.h.b16 %v223
    %v329 = vunpack.c.l.b16 %v224
    %v330 = vunpack.c.h.b16 %v224
    %v331 = vunpack.c.l.b16 %v225
    %v332 = vunpack.c.h.b16 %v225
    %v333 = vunpack.c.l.b16 %v226
    %v334 = vunpack.c.h.b16 %v226
    %v335 = vpack.c.b16 %v273, %v271
    %v336 = vpack.c.b16 %v274, %v272
    %v337 = vpack.c.b16 %v277, %v275
    %v338 = vpack.c.b16 %v278, %v276
    %v339 = vpack.c.b16 %v281, %v279
    %v340 = vpack.c.b16 %v282, %v280
    %v341 = vpack.c.b16 %v285, %v283
    %v342 = vpack.c.b16 %v286, %v284
    %v343 = vpack.c.b16 %v289, %v287
    %v344 = vpack.c.b16 %v290, %v288
    %v345 = vpack.c.b16 %v293, %v291
    %v346 = vpack.c.b16 %v294, %v292
    %v347 = vpack.c.b16 %v297, %v295
    %v348 = vpack.c.b16 %v298, %v296
    %v349 = vpack.c.b16 %v301, %v299
    %v350 = vpack.c.b16 %v302, %v300
    %v351 = vpack.c.b16 %v305, %v303
    %v352 = vpack.c.b16 %v306, %v304
    %v353 = vpack.c.b16 %v309, %v307
    %v354 = vpack.c.b16 %v310, %v308
    %v355 = vpack.c.b16 %v313, %v311
    %v356 = vpack.c.b16 %v314, %v312
    %v357 = vpack.c.b16 %v317, %v315
    %v358 = vpack.c.b16 %v318, %v316
    %v359 = vpack.c.b16 %v321, %v319
    %v360 = vpack.c.b16 %v322, %v320
    %v361 = vpack.c.b16 %v325, %v323
    %v362 = vpack.c.b16 %v326, %v324
    %v363 = vpack.c.b16 %v329, %v327
    %v364 = vpack.c.b16 %v330, %v328
    %v365 = vpack.c.b16 %v333, %v331
    %v366 = vpack.c.b16 %v334, %v332
    %399 = vmatprep.subr.bf16.mxu0 %v336
    %400 = vmatpush1.bf16.msra.mxu0 %v335
    %401 = vmatprep.subr.bf16.mxu0 %v338
    %402 = vmatpush1.bf16.msra.mxu0 %v337
    %403 = vmatprep.subr.bf16.mxu0 %v340
    %404 = vmatpush1.bf16.msra.mxu0 %v339
    %405 = vmatprep.subr.bf16.mxu0 %v342
    %406 = vmatpush1.bf16.msra.mxu0 %v341
    %407 = vmatprep.subr.bf16.mxu0 %v344
    %408 = vmatpush1.bf16.msra.mxu0 %v343
    %409 = vmatprep.subr.bf16.mxu0 %v346
    %410 = vmatpush1.bf16.msra.mxu0 %v345
    %411 = vmatprep.subr.bf16.mxu0 %v348
    %412 = vmatpush1.bf16.msra.mxu0 %v347
    %413 = vmatprep.subr.bf16.mxu0 %v350
    %414 = vmatpush1.bf16.msra.mxu0 %v349
    %415 = vmatprep.subr.bf16.mxu0 %v352
    %416 = vmatpush1.bf16.msra.mxu0 %v351
    %417 = vmatprep.subr.bf16.mxu0 %v354
    %418 = vmatpush1.bf16.msra.mxu0 %v353
    %419 = vmatprep.subr.bf16.mxu0 %v356
    %420 = vmatpush1.bf16.msra.mxu0 %v355
    %421 = vmatprep.subr.bf16.mxu0 %v358
    %422 = vmatpush1.bf16.msra.mxu0 %v357
    %423 = vmatprep.subr.bf16.mxu0 %v360
    %424 = vmatpush1.bf16.msra.mxu0 %v359
    %425 = vmatprep.subr.bf16.mxu0 %v362
    %426 = vmatpush1.bf16.msra.mxu0 %v361
    %427 = vmatprep.subr.bf16.mxu0 %v364
    %428 = vmatpush1.bf16.msra.mxu0 %v363
    %429 = vmatprep.subr.bf16.mxu0 %v366
    %430 = vmatpush1.bf16.msra.mxu0 %v365
    %431 = vmatprep.mubr.bf16.mxu0 %v194
    %432 = vmatmul.mubr.bf16.gmra.mrb[0].mxu0 %v193
    %v433 = vpop.f32.mrb[0].mxu0
    %v434 = vadd.f32 %v232, %v433
    %v435 = vpop.f32.mrb[0].mxu0
    %v436 = vadd.f32 %v236, %v435
    %v437 = vpop.f32.mrb[0].mxu0
    %v438 = vadd.f32 %v232, %v437
    %v439 = vpop.f32.mrb[0].mxu0
    %v440 = vadd.f32 %v236, %v439
    %441 = vdwg.mxu0
    %v442 = vmax.f32 %v434, 0.0
    %v443 = vmax.f32 %v436, 0.0
    %v444 = vmax.f32 %v438, 0.0
    %v445 = vmax.f32 %v440, 0.0
    %v446 = vpack.c.bf16 %v444, %v442
    %v447 = vpack.c.bf16 %v445, %v443
    %v448 = vld [vmem:[#allocation8] sm:$0xf]
    %v449 = vld [vmem:[#allocation8 + $0x4] sm:$0xf]
    %v450 = vld [vmem:[#allocation8 + $0x8] sm:$0xf]
    %v451 = vld [vmem:[#allocation8 + $0xc] sm:$0xf]
    %v452 = vld [vmem:[#allocation8 + $0x10] sm:$0xf]
    %v453 = vld [vmem:[#allocation8 + $0x14] sm:$0xf]
    %v454 = vld [vmem:[#allocation8 + $0x18] sm:$0xf]
    %v455 = vld [vmem:[#allocation8 + $0x1c] sm:$0xf]
    %v456 = vld [vmem:[#allocation8 + $0x20] sm:$0xf]
    %v457 = vld [vmem:[#allocation8 + $0x24] sm:$0xf]
    %v458 = vld [vmem:[#allocation8 + $0x28] sm:$0xf]
    %v459 = vld [vmem:[#allocation8 + $0x2c] sm:$0xf]
    %v460 = vld [vmem:[#allocation8 + $0x30] sm:$0xf]
    %v461 = vld [vmem:[#allocation8 + $0x34] sm:$0xf]
    %v462 = vld [vmem:[#allocation8 + $0x38] sm:$0xf]
    %v463 = vld [vmem:[#allocation8 + $0x3c] sm:$0xf]
    %v464 = vld [vmem:[#allocation8 + $0x40] sm:$0xf]
    %v465 = vld [vmem:[#allocation8 + $0x44] sm:$0xf]
    %v466 = vld [vmem:[#allocation8 + $0x48] sm:$0xf]
    %v467 = vld [vmem:[#allocation8 + $0x4c] sm:$0xf]
    %v468 = vld [vmem:[#allocation8 + $0x50] sm:$0xf]
    %v469 = vld [vmem:[#allocation8 + $0x54] sm:$0xf]
    %v470 = vld [vmem:[#allocation8 + $0x58] sm:$0xf]
    %v471 = vld [vmem:[#allocation8 + $0x5c] sm:$0xf]
    %v472 = vld [vmem:[#allocation8 + $0x60] sm:$0xf]
    %v473 = vld [vmem:[#allocation8 + $0x64] sm:$0xf]
    %v474 = vld [vmem:[#allocation8 + $0x68] sm:$0xf]
    %v475 = vld [vmem:[#allocation8 + $0x6c] sm:$0xf]
    %v476 = vld [vmem:[#allocation8 + $0x70] sm:$0xf]
    %v477 = vld [vmem:[#allocation8 + $0x74] sm:$0xf]
    %v478 = vld [vmem:[#allocation8 + $0x78] sm:$0xf]
    %v479 = vld [vmem:[#allocation8 + $0x7c] sm:$0xf]
    %v480 = vld [vmem:[%s7] sm:$0x1]
    %v482 = vlaneseq
    %v483 = vshrl.u32 %v482, 7
    %v484 = vsub.s32 0, %v483
    %v485 = vrot.slane %v480, %v484
    %v519 = vunpack.c.l.b16 %v448
    %v520 = vunpack.c.l.b16 %v449
    %v521 = vunpack.c.l.b16 %v450
    %v522 = vunpack.c.l.b16 %v451
    %v523 = vunpack.c.l.b16 %v452
    %v524 = vunpack.c.l.b16 %v453
    %v525 = vunpack.c.l.b16 %v454
    %v526 = vunpack.c.l.b16 %v455
    %v527 = vunpack.c.l.b16 %v456
    %v528 = vunpack.c.l.b16 %v457
    %v529 = vunpack.c.l.b16 %v458
    %v530 = vunpack.c.l.b16 %v459
    %v531 = vunpack.c.l.b16 %v460
    %v532 = vunpack.c.l.b16 %v461
    %v533 = vunpack.c.l.b16 %v462
    %v534 = vunpack.c.l.b16 %v463
    %v535 = vunpack.c.l.b16 %v464
    %v536 = vunpack.c.l.b16 %v465
    %v537 = vunpack.c.l.b16 %v466
    %v538 = vunpack.c.l.b16 %v467
    %v539 = vunpack.c.l.b16 %v468
    %v540 = vunpack.c.l.b16 %v469
    %v541 = vunpack.c.l.b16 %v470
    %v542 = vunpack.c.l.b16 %v471
    %v543 = vunpack.c.l.b16 %v472
    %v544 = vunpack.c.l.b16 %v473
    %v545 = vunpack.c.l.b16 %v474
    %v546 = vunpack.c.l.b16 %v475
    %v547 = vunpack.c.l.b16 %v476
    %v548 = vunpack.c.l.b16 %v477
    %v549 = vunpack.c.l.b16 %v478
    %v550 = vunpack.c.l.b16 %v479
    %v551 = vpack.c.b16 %v520, %v519
    %v552 = vpack.c.b16 %v522, %v521
    %v553 = vpack.c.b16 %v524, %v523
    %v554 = vpack.c.b16 %v526, %v525
    %v555 = vpack.c.b16 %v528, %v527
    %v556 = vpack.c.b16 %v530, %v529
    %v557 = vpack.c.b16 %v532, %v531
    %v558 = vpack.c.b16 %v534, %v533
    %v559 = vpack.c.b16 %v536, %v535
    %v560 = vpack.c.b16 %v538, %v537
    %v561 = vpack.c.b16 %v540, %v539
    %v562 = vpack.c.b16 %v542, %v541
    %v563 = vpack.c.b16 %v544, %v543
    %v564 = vpack.c.b16 %v546, %v545
    %v565 = vpack.c.b16 %v548, %v547
    %v566 = vpack.c.b16 %v550, %v549
    %583 = vmatprep.subr.bf16.mxu0 0
    %584 = vmatpush1.bf16.msra.mxu0 %v551
    %585 = vmatprep.subr.bf16.mxu0 0
    %586 = vmatpush1.bf16.msra.mxu0 %v552
    %587 = vmatprep.subr.bf16.mxu0 0
    %588 = vmatpush1.bf16.msra.mxu0 %v553
    %589 = vmatprep.subr.bf16.mxu0 0
    %590 = vmatpush1.bf16.msra.mxu0 %v554
    %591 = vmatprep.subr.bf16.mxu0 0
    %592 = vmatpush1.bf16.msra.mxu0 %v555
    %593 = vmatprep.subr.bf16.mxu0 0
    %594 = vmatpush1.bf16.msra.mxu0 %v556
    %595 = vmatprep.subr.bf16.mxu0 0
    %596 = vmatpush1.bf16.msra.mxu0 %v557
    %597 = vmatprep.subr.bf16.mxu0 0
    %598 = vmatpush1.bf16.msra.mxu0 %v558
    %599 = vmatprep.subr.bf16.mxu0 0
    %600 = vmatpush1.bf16.msra.mxu0 %v559
    %601 = vmatprep.subr.bf16.mxu0 0
    %602 = vmatpush1.bf16.msra.mxu0 %v560
    %603 = vmatprep.subr.bf16.mxu0 0
    %604 = vmatpush1.bf16.msra.mxu0 %v561
    %605 = vmatprep.subr.bf16.mxu0 0
    %606 = vmatpush1.bf16.msra.mxu0 %v562
    %607 = vmatprep.subr.bf16.mxu0 0
    %608 = vmatpush1.bf16.msra.mxu0 %v563
    %609 = vmatprep.subr.bf16.mxu0 0
    %610 = vmatpush1.bf16.msra.mxu0 %v564
    %611 = vmatprep.subr.bf16.mxu0 0
    %612 = vmatpush1.bf16.msra.mxu0 %v565
    %613 = vmatprep.subr.bf16.mxu0 0
    %614 = vmatpush1.bf16.msra.mxu0 %v566
    %615 = vmatprep.mubr.bf16.mxu0 %v447
    %616 = vmatmul.mubr.bf16.gmra.mrb[0].mxu0 %v446
    %v617 = vpop.f32.mrb[0].mxu0
    %v618 = vadd.f32 %v485, %v617
    %v619 = vpop.f32.mrb[0].mxu0
    %v620 = vpop.f32.mrb[0].mxu0
    %v621 = vadd.f32 %v485, %v620
    %v622 = vpop.f32.mrb[0].mxu0
    %623 = vdwg.mxu0
    %v624 = vtanh.pop %v618
    %v625 = vtanh.pop %v621
    %v626 = vstv %s86
    %v627 = vmul.f32 %v626, %v624
    %v628 = vmul.f32 %v626, %v625
    %vm629 = vcmask 64512
    %630 = vst.msk [vmem:[%s8] sm:$0xff] %vm629, %v627
    %631 = vst.msk [vmem:[%s8 + $0x8] sm:$0xff] %vm629, %v628
    // Predicated region
    $region50: #{tpu_custom_call.1} parent=1 // pred_check
      _
    $region51: #{tpu_custom_call.1} parent=1 // pred_check_branch
      %633 = sbr.rel (0) target = $region53
    $region52: #{tpu_custom_call.1} parent=1 // pred_region
      _
    $region53: #{tpu_custom_call.1} parent=1 // pred_fallthru
      _
    // Predicated region
    $region54: #{tpu_custom_call.1} parent=1 // pred_check
      _
    $region55: #{tpu_custom_call.1} parent=1 // pred_check_branch
      %635 = sbr.rel (0) target = $region57
    $region56: #{tpu_custom_call.1} parent=1 // pred_region
      _
    $region57: #{tpu_custom_call.1} parent=1 // pred_fallthru
      _
    %636 = vsyncpa [#allocation4], 1
    %637 = vsyncpa [#allocation6], 1
    %638 = vsyncpa [#allocation9], 1

</llo_original>
